<compile_context>
chip_gen: v7x
topology: tpu7x:2x2x1
jax: 0.10.0
libtpu: 0.0.40
codegen_flags: <defaults>
</compile_context>

<pallas_src>
import functools

import jax
import jax.numpy as jnp
from jax.experimental import pallas as pl
from jax.experimental.pallas import tpu as pltpu


# ----------------------------------------------------------------------------
# Pallas kernel: all n Monte-Carlo dropout forward passes fused in one call.
# ----------------------------------------------------------------------------
def _mc_dropout_mlp_kernel(x_ref, w1_ref, b1_ref, w2_ref, b2_ref, mask_ref,
                           mc_ref, mean_ref):
    n, b, hdim = mask_ref.shape        # static (n, B, H)
    cpad = mc_ref.shape[-1]            # static padded class dim (multiple of 128)

    # Hidden layer computed ONCE (shared across all MC samples): (B, H).
    h = jnp.dot(x_ref[...], w1_ref[...], preferred_element_type=jnp.float32)
    h = jnp.maximum(h + b1_ref[...], 0.0)

    # Per-sample binary dropout masks (1/(1-p) already folded into W2): (n*B, H).
    hd = (mask_ref[...] * h[None, :, :]).reshape(n * b, hdim)

    # Single fused output matmul over all MC samples: (n*B, C_pad).
    logits = jnp.dot(hd, w2_ref[...], preferred_element_type=jnp.float32)
    logits = logits + b2_ref[...]

    # Softmax over the (padded) class axis. Padded classes carry a -1e9 bias,
    # so exp underflows to exactly 0 and real-class probabilities sum to 1.
    m = jnp.max(logits, axis=-1, keepdims=True)
    e = jnp.exp(logits - m)
    # One reciprocal per row, then a broadcast multiply (cheaper than a
    # full-width divide).  pl.reciprocal(..., approx=True) would push this to
    # the EUP on hardware but is skipped for interpret-mode portability.
    inv = 1.0 / jnp.sum(e, axis=-1, keepdims=True)
    probs = e * inv

    probs3 = probs.reshape(n, b, cpad)
    mc_ref[...] = probs3.astype(mc_ref.dtype)
    mean_ref[...] = jnp.mean(probs3, axis=0).astype(mean_ref.dtype)


@functools.partial(jax.jit, static_argnames=("dropout_p",))
def mc_dropout_forward(x, w1, b1, w2, b2, keep_mask, *, dropout_p=0.5):
    """Fused MC-dropout forward.

    Returns (MC_array [n, B, C], mean [B, C]); mean is the module's forward output.
    `keep_mask` is an (n, B, H) float32 array of 0/1 Bernoulli(1 - dropout_p) draws.
    """
    B, Din = x.shape
    H = w1.shape[1]
    C = w2.shape[1]
    n = keep_mask.shape[0]
    C_pad = ((C + 127) // 128) * 128   # lane-dense output width

    scale = 1.0 / (1.0 - dropout_p) if dropout_p > 0.0 else 1.0
    # Fold the dropout survivor scale into W2; zero-pad extra class columns.
    w2_p = jnp.zeros((H, C_pad), jnp.float32).at[:, :C].set(w2 * scale)
    # Padded class biases get -1e9 so their softmax probability is exactly 0.
    b2_p = jnp.full((1, C_pad), -1e9, jnp.float32).at[0, :C].set(b2)
    b1_2d = b1.reshape(1, H).astype(jnp.float32)

    mc_pad, mean_pad = pl.pallas_call(
        _mc_dropout_mlp_kernel,
        out_shape=(
            jax.ShapeDtypeStruct((n, B, C_pad), jnp.float32),
            jax.ShapeDtypeStruct((B, C_pad), jnp.float32),
        ),
        grid=(1,),
        in_specs=[
            pl.BlockSpec((B, Din), lambda i: (0, 0)),
            pl.BlockSpec((Din, H), lambda i: (0, 0)),
            pl.BlockSpec((1, H), lambda i: (0, 0)),
            pl.BlockSpec((H, C_pad), lambda i: (0, 0)),
            pl.BlockSpec((1, C_pad), lambda i: (0, 0)),
            pl.BlockSpec((n, B, H), lambda i: (0, 0, 0)),
        ],
        out_specs=(
            pl.BlockSpec((n, B, C_pad), lambda i: (0, 0, 0)),
            pl.BlockSpec((B, C_pad), lambda i: (0, 0)),
        ),
    )(x.astype(jnp.float32), w1.astype(jnp.float32), b1_2d, w2_p, b2_p, keep_mask)

    return mc_pad[:, :, :C], mean_pad[:, :C]


# ----------------------------------------------------------------------------
# Thin JAX-side wrapper mirroring the torch MonteCarloDropout module API.
# (get_var / get_MI are cheap post-processing glue on the kernel's MC array.)
# ----------------------------------------------------------------------------
def _entropy(y_pred, reduction="mean"):
    yc = jnp.clip(y_pred, 1e-12, 1.0)          # avoid NaN from 0 * log(0)
    ent = jnp.sum(-yc * jnp.log(yc), axis=-1)
    if reduction == "mean":
        ent = jnp.mean(ent)
    elif reduction == "sum":
        ent = jnp.sum(ent)
    return ent


class MonteCarloDropout:
    # TODO(synk): the wrapped torch model is unspecified; a fixed 2-layer
    # MLP-with-dropout stands in for it.
    def __init__(self, params, n=10, dropout_p=0.5):
        assert 0.0 <= dropout_p < 1.0, "dropout_p must lie in [0, 1)"
        self.params = params
        self.n = n
        self.dropout_p = dropout_p
        self.MC_array = None
        self._keep_mask = None

    def forward(self, x, seed=0):
        w1, b1, w2, b2 = self.params
        key = jax.random.PRNGKey(seed)
        keep = jax.random.bernoulli(
            key, p=1.0 - self.dropout_p, shape=(self.n, x.shape[0], w1.shape[1])
        ).astype(jnp.float32)
        self._keep_mask = keep
        self.MC_array, mean = mc_dropout_forward(
            x, w1, b1, w2, b2, keep, dropout_p=self.dropout_p
        )
        return mean

    def get_var(self):
        # torch.var defaults to unbiased (ddof=1), then mean over last axis.
        var = jnp.var(self.MC_array, axis=0, ddof=1)
        return jnp.mean(var, axis=-1)

    def get_MI(self):
        ent_of_mean = _entropy(jnp.mean(self.MC_array, axis=0))
        mean_of_ent = jnp.mean(_entropy(self.MC_array))
        return ent_of_mean - mean_of_ent


if __name__ == "__main__":
    # Deterministic synthetic parameters / inputs (no checkpoint loading).
    B, Din, H, C, N = 8, 32, 64, 16, 10
    P = 0.5
    key = jax.random.PRNGKey(0)
    kx, k1, k2, k3, k4 = jax.random.split(key, 5)
    x = jax.random.normal(kx, (B, Din), dtype=jnp.float32)
    w1 = jax.random.normal(k1, (Din, H), dtype=jnp.float32) * (1.0 / jnp.sqrt(Din))
    b1 = jax.random.normal(k2, (H,), dtype=jnp.float32) * 0.1
    w2 = jax.random.normal(k3, (H, C), dtype=jnp.float32) * (1.0 / jnp.sqrt(H))
    b2 = jax.random.normal(k4, (C,), dtype=jnp.float32) * 0.1

    mcd = MonteCarloDropout((w1, b1, w2, b2), n=N, dropout_p=P)
    mean = mcd.forward(x, seed=1234)
    var = mcd.get_var()
    mi = mcd.get_MI()
    jax.block_until_ready((mean, var, mi))

    assert mean.shape == (B, C)
    assert mcd.MC_array.shape == (N, B, C)
    assert var.shape == (B,)
    assert bool(jnp.all(jnp.isfinite(mean))) and bool(jnp.isfinite(mi))
    # Rows of the mean prediction are averages of softmaxes -> sum to ~1.
    assert bool(jnp.allclose(jnp.sum(mean, axis=-1), 1.0, atol=1e-3))

    # Pure-JAX reference with identical dropout masks.
    keep = mcd._keep_mask
    hp = jax.lax.Precision.HIGHEST
    h_ref = jnp.maximum(jnp.dot(x, w1, precision=hp) + b1, 0.0)
    hd_ref = h_ref[None, :, :] * keep * (1.0 / (1.0 - P))
    logits_ref = jnp.einsum("nbh,hc->nbc", hd_ref, w2, precision=hp) + b2
    ref_probs = jax.nn.softmax(logits_ref, axis=-1)
    assert bool(jnp.allclose(mcd.MC_array, ref_probs, atol=2e-3, rtol=2e-3))
    assert bool(jnp.allclose(mean, jnp.mean(ref_probs, axis=0), atol=2e-3, rtol=2e-3))

    print("KERNEL_OK")
</pallas_src>

<mosaic_0001>
module attributes {stable_mosaic.version = 11 : i64} {
  func.func @_mc_dropout_mlp_kernel(%arg0: i32, %arg1: memref<8x32xf32, #tpu.memory_space<vmem>>, %arg2: memref<32x64xf32, #tpu.memory_space<vmem>>, %arg3: memref<1x64xf32, #tpu.memory_space<vmem>>, %arg4: memref<64x128xf32, #tpu.memory_space<vmem>>, %arg5: memref<1x128xf32, #tpu.memory_space<vmem>>, %arg6: memref<10x8x64xf32, #tpu.memory_space<vmem>>, %arg7: memref<10x8x128xf32, #tpu.memory_space<vmem>>, %arg8: memref<8x128xf32, #tpu.memory_space<vmem>>) attributes {dimension_semantics = [#tpu.dimension_semantics<arbitrary>], iteration_bounds = array<i64: 1>, scalar_prefetch = 0 : i64, scratch_operands = 0 : i64, tpu.core_type = #tpu.core_type<tc>, window_params = [{pipeline_mode = #tpu.pipeline_mode<synchronous>, transform_indices = @transform_0, window_bounds = array<i64: 8, 32>}, {pipeline_mode = #tpu.pipeline_mode<synchronous>, transform_indices = @transform_1, window_bounds = array<i64: 32, 64>}, {pipeline_mode = #tpu.pipeline_mode<synchronous>, transform_indices = @transform_2, window_bounds = array<i64: 1, 64>}, {pipeline_mode = #tpu.pipeline_mode<synchronous>, transform_indices = @transform_3, window_bounds = array<i64: 64, 128>}, {pipeline_mode = #tpu.pipeline_mode<synchronous>, transform_indices = @transform_4, window_bounds = array<i64: 1, 128>}, {pipeline_mode = #tpu.pipeline_mode<synchronous>, transform_indices = @transform_5, window_bounds = array<i64: 10, 8, 64>}, {pipeline_mode = #tpu.pipeline_mode<synchronous>, transform_indices = @transform_6, window_bounds = array<i64: 10, 8, 128>}, {pipeline_mode = #tpu.pipeline_mode<synchronous>, transform_indices = @transform_7, window_bounds = array<i64: 8, 128>}]} {
    %c0 = arith.constant 0 : index
    %c0_0 = arith.constant 0 : index
    %0 = vector.load %arg1[%c0, %c0_0] : memref<8x32xf32, #tpu.memory_space<vmem>>, vector<8x32xf32>
    %c0_1 = arith.constant 0 : index
    %c0_2 = arith.constant 0 : index
    %1 = vector.load %arg2[%c0_1, %c0_2] : memref<32x64xf32, #tpu.memory_space<vmem>>, vector<32x64xf32>
    %cst = arith.constant dense<0.000000e+00> : vector<8x64xf32>
    %2 = tpu.matmul %0, %1, %cst {dimension_numbers = #tpu.dot_dimension_numbers<[1], [0], [0], [1], [0, 0, 1, 1], [], []>} : vector<8x32xf32>, vector<32x64xf32>, vector<8x64xf32> -> vector<8x64xf32>
    %c0_3 = arith.constant 0 : index
    %c0_4 = arith.constant 0 : index
    %3 = vector.load %arg3[%c0_3, %c0_4] : memref<1x64xf32, #tpu.memory_space<vmem>>, vector<1x64xf32>
    %4 = vector.broadcast %3 : vector<1x64xf32> to vector<8x64xf32>
    %5 = arith.addf %2, %4 : vector<8x64xf32>
    %cst_5 = arith.constant 0.000000e+00 : f32
    %6 = vector.broadcast %cst_5 : f32 to vector<8x64xf32>
    %7 = arith.maximumf %5, %6 : vector<8x64xf32>
    %c0_6 = arith.constant 0 : index
    %c0_7 = arith.constant 0 : index
    %c0_8 = arith.constant 0 : index
    %8 = vector.load %arg6[%c0_6, %c0_7, %c0_8] : memref<10x8x64xf32, #tpu.memory_space<vmem>>, vector<10x8x64xf32>
    %9 = vector.shape_cast %7 : vector<8x64xf32> to vector<1x8x64xf32>
    %10 = vector.broadcast %9 : vector<1x8x64xf32> to vector<10x8x64xf32>
    %11 = arith.mulf %8, %10 : vector<10x8x64xf32>
    %12 = vector.shape_cast %11 : vector<10x8x64xf32> to vector<80x64xf32>
    %c0_9 = arith.constant 0 : index
    %c0_10 = arith.constant 0 : index
    %13 = vector.load %arg4[%c0_9, %c0_10] : memref<64x128xf32, #tpu.memory_space<vmem>>, vector<64x128xf32>
    %cst_11 = arith.constant dense<0.000000e+00> : vector<80x128xf32>
    %14 = tpu.matmul %12, %13, %cst_11 {dimension_numbers = #tpu.dot_dimension_numbers<[1], [0], [0], [1], [0, 0, 1, 1], [], []>} : vector<80x64xf32>, vector<64x128xf32>, vector<80x128xf32> -> vector<80x128xf32>
    %c0_12 = arith.constant 0 : index
    %c0_13 = arith.constant 0 : index
    %15 = vector.load %arg5[%c0_12, %c0_13] : memref<1x128xf32, #tpu.memory_space<vmem>>, vector<1x128xf32>
    %16 = vector.broadcast %15 : vector<1x128xf32> to vector<80x128xf32>
    %17 = arith.addf %14, %16 : vector<80x128xf32>
    %cst_14 = arith.constant dense<0xFF800000> : vector<80xf32>
    %18 = vector.multi_reduction <maximumf>, %17, %cst_14 [1] : vector<80x128xf32> to vector<80xf32>
    %19 = vector.shape_cast %18 : vector<80xf32> to vector<80x1xf32>
    %20 = vector.broadcast %19 : vector<80x1xf32> to vector<80x128xf32>
    %21 = arith.subf %17, %20 : vector<80x128xf32>
    %22 = math.exp %21 : vector<80x128xf32>
    %cst_15 = arith.constant dense<0.000000e+00> : vector<80xf32>
    %23 = vector.multi_reduction <add>, %22, %cst_15 [1] : vector<80x128xf32> to vector<80xf32>
    %24 = vector.shape_cast %23 : vector<80xf32> to vector<80x1xf32>
    %cst_16 = arith.constant 1.000000e+00 : f32
    %25 = vector.broadcast %cst_16 : f32 to vector<80x1xf32>
    %26 = arith.divf %25, %24 : vector<80x1xf32>
    %27 = vector.broadcast %26 : vector<80x1xf32> to vector<80x128xf32>
    %28 = arith.mulf %22, %27 : vector<80x128xf32>
    %29 = vector.shape_cast %28 : vector<80x128xf32> to vector<10x8x128xf32>
    %c0_17 = arith.constant 0 : index
    %c0_18 = arith.constant 0 : index
    %c0_19 = arith.constant 0 : index
    %30 = vector.load %arg7[%c0_17, %c0_18, %c0_19] : memref<10x8x128xf32, #tpu.memory_space<vmem>>, vector<10x8x128xf32>
    tpu.vector_store %arg7[%c0_17, %c0_18, %c0_19], %29 {strides = array<i32>} : memref<10x8x128xf32, #tpu.memory_space<vmem>>, vector<10x8x128xf32>,
    %cst_20 = arith.constant dense<0.000000e+00> : vector<8x128xf32>
    %31 = vector.multi_reduction <add>, %29, %cst_20 [0] : vector<10x8x128xf32> to vector<8x128xf32>
    %cst_21 = arith.constant 1.000000e+01 : f32
    %32 = vector.broadcast %cst_21 : f32 to vector<8x128xf32>
    %33 = arith.divf %31, %32 : vector<8x128xf32>
    %c0_22 = arith.constant 0 : index
    %c0_23 = arith.constant 0 : index
    %34 = vector.load %arg8[%c0_22, %c0_23] : memref<8x128xf32, #tpu.memory_space<vmem>>, vector<8x128xf32>
    tpu.vector_store %arg8[%c0_22, %c0_23], %33 {strides = array<i32>} : memref<8x128xf32, #tpu.memory_space<vmem>>, vector<8x128xf32>,
    return
  }
  func.func @transform_0(%arg0: i32) -> (i32, i32) {
    %c0_i32 = arith.constant 0 : i32
    %c0_i32_0 = arith.constant 0 : i32
    %c0_i32_1 = arith.constant 0 : i32
    return %c0_i32, %c0_i32_0 : i32, i32
  }
  func.func @transform_1(%arg0: i32) -> (i32, i32) {
    %c0_i32 = arith.constant 0 : i32
    %c0_i32_0 = arith.constant 0 : i32
    %c0_i32_1 = arith.constant 0 : i32
    return %c0_i32, %c0_i32_0 : i32, i32
  }
  func.func @transform_2(%arg0: i32) -> (i32, i32) {
    %c0_i32 = arith.constant 0 : i32
    %c0_i32_0 = arith.constant 0 : i32
    %c0_i32_1 = arith.constant 0 : i32
    return %c0_i32, %c0_i32_0 : i32, i32
  }
  func.func @transform_3(%arg0: i32) -> (i32, i32) {
    %c0_i32 = arith.constant 0 : i32
    %c0_i32_0 = arith.constant 0 : i32
    %c0_i32_1 = arith.constant 0 : i32
    return %c0_i32, %c0_i32_0 : i32, i32
  }
  func.func @transform_4(%arg0: i32) -> (i32, i32) {
    %c0_i32 = arith.constant 0 : i32
    %c0_i32_0 = arith.constant 0 : i32
    %c0_i32_1 = arith.constant 0 : i32
    return %c0_i32, %c0_i32_0 : i32, i32
  }
  func.func @transform_5(%arg0: i32) -> (i32, i32, i32) {
    %c0_i32 = arith.constant 0 : i32
    %c0_i32_0 = arith.constant 0 : i32
    %c0_i32_1 = arith.constant 0 : i32
    %c0_i32_2 = arith.constant 0 : i32
    return %c0_i32, %c0_i32_0, %c0_i32_1 : i32, i32, i32
  }
  func.func @transform_6(%arg0: i32) -> (i32, i32, i32) {
    %c0_i32 = arith.constant 0 : i32
    %c0_i32_0 = arith.constant 0 : i32
    %c0_i32_1 = arith.constant 0 : i32
    %c0_i32_2 = arith.constant 0 : i32
    return %c0_i32, %c0_i32_0, %c0_i32_1 : i32, i32, i32
  }
  func.func @transform_7(%arg0: i32) -> (i32, i32) {
    %c0_i32 = arith.constant 0 : i32
    %c0_i32_0 = arith.constant 0 : i32
    %c0_i32_1 = arith.constant 0 : i32
    return %c0_i32, %c0_i32_0 : i32, i32
  }
}

</mosaic_0001>

<llo_original>
// kernel: mc_dropout_forward.1
$region0: #{mc_dropout_forward.1}
  #allocation0 [shape = 'u32[]', space=smem, size = 0x4, offset = 0x4, fixed_abs, tag = 'smem constant byte address 0x4 - core index']
  #allocation1 [shape = 'u32[144,128]{1,0:T(1,128)}', space=vmem, size = 0x12000, scoped, tag = 'internal scratch']
  %s0 = inlined_call_operand.vmem [shape: f32[8,32], index: 0, kind: input, shape index: {}]
  %s1 = inlined_call_operand.vmem [shape: f32[32,64], index: 1, kind: input, shape index: {}]
  %s2 = inlined_call_operand.vmem [shape: f32[1,64], index: 2, kind: input, shape index: {}]
  %s3 = inlined_call_operand.vmem [shape: f32[64,128], index: 3, kind: input, shape index: {}]
  %s4 = inlined_call_operand.vmem [shape: f32[1,128], index: 4, kind: input, shape index: {}]
  %s5 = inlined_call_operand.vmem [shape: f32[10,8,64], index: 5, kind: input, shape index: {}]
  %s6 = inlined_call_operand.hbm [shape: f32[10,8,128], index: 6, kind: output, shape index: {0}]
  %s7 = inlined_call_operand.hbm [shape: f32[8,128], index: 7, kind: output, shape index: {1}]
  %8 = xla_tuple %s6, %s7
  %s9 = sld [smem:[#allocation0]]
  $region42: #{mc_dropout_forward.1} parent=0
    _
  %s11 = ssub.s32 1, %s9
  %s12 = scalar_select 0, %s11, %s9
  $region1: #{mc_dropout_forward.1} parent=0
    #allocation2 [shape = 'u8[40960]{0}', space=vmem, size = 0xa000, scoped, tag = 'output window, operand 0, single buffered']
    #allocation3 [shape = 's32[1]{0}', space=sflag, size = 0x4, scoped, tag = 'scoped memory for mc_dropout_forward.1']
    #allocation4 [shape = 'u8[4096]{0}', space=vmem, size = 0x1000, scoped, tag = 'output window, operand 1, single buffered']
    #allocation5 [shape = 's32[1]{0}', space=sflag, size = 0x4, scoped, tag = 'scoped memory for mc_dropout_forward.1']
    %13 = vsyncpa [#allocation3], 0
    %14 = vsyncpa [#allocation5], 0
    // Predicated region
    $region2: #{mc_dropout_forward.1} parent=1 // pred_check
      _
    $region3: #{mc_dropout_forward.1} parent=1 // pred_check_branch
      %16 = sbr.rel (0) target = $region5
    $region4: #{mc_dropout_forward.1} parent=1 // pred_region
      _
    $region5: #{mc_dropout_forward.1} parent=1 // pred_fallthru
      _
    // Predicated region
    $region6: #{mc_dropout_forward.1} parent=1 // pred_check
      _
    $region7: #{mc_dropout_forward.1} parent=1 // pred_check_branch
      %18 = sbr.rel (0) target = $region9
    $region8: #{mc_dropout_forward.1} parent=1 // pred_region
      _
    $region9: #{mc_dropout_forward.1} parent=1 // pred_fallthru
      _
    // Predicated region
    $region10: #{mc_dropout_forward.1} parent=1 // pred_check
      _
    $region11: #{mc_dropout_forward.1} parent=1 // pred_check_branch
      %20 = sbr.rel (0) target = $region13
    $region12: #{mc_dropout_forward.1} parent=1 // pred_region
      _
    $region13: #{mc_dropout_forward.1} parent=1 // pred_fallthru
      _
    // Predicated region
    $region14: #{mc_dropout_forward.1} parent=1 // pred_check
      _
    $region15: #{mc_dropout_forward.1} parent=1 // pred_check_branch
      %22 = sbr.rel (0) target = $region17
    $region16: #{mc_dropout_forward.1} parent=1 // pred_region
      _
    $region17: #{mc_dropout_forward.1} parent=1 // pred_fallthru
      _
    // Predicated region
    $region18: #{mc_dropout_forward.1} parent=1 // pred_check
      _
    $region19: #{mc_dropout_forward.1} parent=1 // pred_check_branch
      %24 = sbr.rel (0) target = $region21
    $region20: #{mc_dropout_forward.1} parent=1 // pred_region
      _
    $region21: #{mc_dropout_forward.1} parent=1 // pred_fallthru
      _
    // Predicated region
    $region22: #{mc_dropout_forward.1} parent=1 // pred_check
      _
    $region23: #{mc_dropout_forward.1} parent=1 // pred_check_branch
      %26 = sbr.rel (0) target = $region25
    $region24: #{mc_dropout_forward.1} parent=1 // pred_region
      _
    $region25: #{mc_dropout_forward.1} parent=1 // pred_fallthru
      _
    %v27 = vld [vmem:[%s0] sm:$0xff]
    %v28 = vld [vmem:[%s1] sm:$0xff]
    %v29 = vld [vmem:[%s1 + $0x8] sm:$0xff]
    %v30 = vld [vmem:[%s1 + $0x10] sm:$0xff]
    %v31 = vld [vmem:[%s1 + $0x18] sm:$0xff]
    %v32 = vld [vmem:[%s2] sm:$0x1]
    %v34 = vlaneseq
    %v35 = vshrl.u32 %v34, 7
    %v36 = vsub.s32 0, %v35
    %v37 = vrot.slane %v32, %v36
    %vm39 = vcmask 261120
    %v41 = vsel %vm39, %v27, 0
    %43 = vmatprep.subr.mxu0 0.0
    %44 = vmatpush1.msra.mxu0 %v28
    %45 = vmatprep.subr.mxu0 0.0
    %46 = vmatpush1.msra.mxu0 %v29
    %47 = vmatprep.subr.mxu0 0.0
    %48 = vmatpush1.msra.mxu0 %v30
    %49 = vmatprep.subr.mxu0 0.0
    %50 = vmatpush1.msra.mxu0 %v31
    %51 = vmatprep.subr.mxu0 0.0
    %52 = vmatpush1.msra.mxu0 0.0
    %53 = vmatprep.subr.mxu0 0.0
    %54 = vmatpush1.msra.mxu0 0.0
    %55 = vmatprep.subr.mxu0 0.0
    %56 = vmatpush1.msra.mxu0 0.0
    %57 = vmatprep.subr.mxu0 0.0
    %58 = vmatpush1.msra.mxu0 0.0
    %59 = vmatprep.subr.mxu0 0.0
    %60 = vmatpush1.msra.mxu0 0.0
    %61 = vmatprep.subr.mxu0 0.0
    %62 = vmatpush1.msra.mxu0 0.0
    %63 = vmatprep.subr.mxu0 0.0
    %64 = vmatpush1.msra.mxu0 0.0
    %65 = vmatprep.subr.mxu0 0.0
    %66 = vmatpush1.msra.mxu0 0.0
    %67 = vmatprep.subr.mxu0 0.0
    %68 = vmatpush1.msra.mxu0 0.0
    %69 = vmatprep.subr.mxu0 0.0
    %70 = vmatpush1.msra.mxu0 0.0
    %71 = vmatprep.subr.mxu0 0.0
    %72 = vmatpush1.msra.mxu0 0.0
    %73 = vmatprep.subr.mxu0 0.0
    %74 = vmatpush1.msra.mxu0 0.0
    %75 = vmatprep.subr.mxu0 0.0
    %76 = vmatpush1.msra.mxu0 0.0
    %77 = vmatprep.subr.mxu0 0.0
    %78 = vmatpush1.msra.mxu0 0.0
    %79 = vmatprep.subr.mxu0 0.0
    %80 = vmatpush1.msra.mxu0 0.0
    %81 = vmatprep.subr.mxu0 0.0
    %82 = vmatpush1.msra.mxu0 0.0
    %83 = vmatprep.subr.mxu0 0.0
    %84 = vmatpush1.msra.mxu0 0.0
    %85 = vmatprep.subr.mxu0 0.0
    %86 = vmatpush1.msra.mxu0 0.0
    %87 = vmatprep.subr.mxu0 0.0
    %88 = vmatpush1.msra.mxu0 0.0
    %89 = vmatprep.subr.mxu0 0.0
    %90 = vmatpush1.msra.mxu0 0.0
    %91 = vmatprep.subr.mxu0 0.0
    %92 = vmatpush1.msra.mxu0 0.0
    %93 = vmatprep.subr.mxu0 0.0
    %94 = vmatpush1.msra.mxu0 0.0
    %95 = vmatprep.subr.mxu0 0.0
    %96 = vmatpush1.msra.mxu0 0.0
    %97 = vmatprep.subr.mxu0 0.0
    %98 = vmatpush1.msra.mxu0 0.0
    %99 = vmatprep.subr.mxu0 0.0
    %100 = vmatpush1.msra.mxu0 0.0
    %101 = vmatprep.subr.mxu0 0.0
    %102 = vmatpush1.msra.mxu0 0.0
    %103 = vmatprep.subr.mxu0 0.0
    %104 = vmatpush1.msra.mxu0 0.0
    %105 = vmatprep.subr.mxu0 0.0
    %106 = vmatpush1.msra.mxu0 0.0
    %107 = vmatprep.mubr.f32.mxu0 0.0
    %108 = vmatmul.mubr.f32.gmra.mrb[0].mxu0 %v41
    %v109 = vpop.f32.mrb[0].mxu0
    %v110 = vadd.f32 %v37, %v109
    %v111 = vpop.f32.mrb[0].mxu0
    %112 = vdwg.mxu0
    %v113 = vmax.f32 %v110, 0.0
    %v114 = vld [vmem:[%s5] sm:$0xff]
    %v115 = vld [vmem:[%s5 + $0x8] sm:$0xff]
    %v116 = vld [vmem:[%s5 + $0x10] sm:$0xff]
    %v117 = vld [vmem:[%s5 + $0x18] sm:$0xff]
    %v118 = vld [vmem:[%s5 + $0x20] sm:$0xff]
    %v119 = vld [vmem:[%s5 + $0x28] sm:$0xff]
    %v120 = vld [vmem:[%s5 + $0x30] sm:$0xff]
    %v121 = vld [vmem:[%s5 + $0x38] sm:$0xff]
    %v122 = vld [vmem:[%s5 + $0x40] sm:$0xff]
    %v123 = vld [vmem:[%s5 + $0x48] sm:$0xff]
    %v124 = vmul.f32 %v114, %v113
    %v125 = vmul.f32 %v115, %v113
    %v126 = vmul.f32 %v116, %v113
    %v127 = vmul.f32 %v117, %v113
    %v128 = vmul.f32 %v118, %v113
    %v129 = vmul.f32 %v119, %v113
    %v130 = vmul.f32 %v120, %v113
    %v131 = vmul.f32 %v121, %v113
    %v132 = vmul.f32 %v122, %v113
    %v133 = vmul.f32 %v123, %v113
    %v134 = vld [vmem:[%s3] sm:$0xff]
    %v135 = vld [vmem:[%s3 + $0x8] sm:$0xff]
    %v136 = vld [vmem:[%s3 + $0x10] sm:$0xff]
    %v137 = vld [vmem:[%s3 + $0x18] sm:$0xff]
    %v138 = vld [vmem:[%s3 + $0x20] sm:$0xff]
    %v139 = vld [vmem:[%s3 + $0x28] sm:$0xff]
    %v140 = vld [vmem:[%s3 + $0x30] sm:$0xff]
    %v141 = vld [vmem:[%s3 + $0x38] sm:$0xff]
    %v142 = vld [vmem:[%s4] sm:$0x1]
    %v144 = vlaneseq
    %v145 = vshrl.u32 %v144, 7
    %v146 = vsub.s32 0, %v145
    %v147 = vrot.slane %v142, %v146
    %vm149 = vcmask 523264
    %v151 = vsel %vm149, %v124, 0
    %v154 = vsel %vm149, %v125, 0
    %v157 = vsel %vm149, %v126, 0
    %v160 = vsel %vm149, %v127, 0
    %v163 = vsel %vm149, %v128, 0
    %v166 = vsel %vm149, %v129, 0
    %v169 = vsel %vm149, %v130, 0
    %v172 = vsel %vm149, %v131, 0
    %v175 = vsel %vm149, %v132, 0
    %v178 = vsel %vm149, %v133, 0
    %180 = vmatprep.subr.mxu0 0.0
    %181 = vmatpush1.msra.mxu0 %v134
    %182 = vmatprep.subr.mxu0 0.0
    %183 = vmatpush1.msra.mxu0 %v135
    %184 = vmatprep.subr.mxu0 0.0
    %185 = vmatpush1.msra.mxu0 %v136
    %186 = vmatprep.subr.mxu0 0.0
    %187 = vmatpush1.msra.mxu0 %v137
    %188 = vmatprep.subr.mxu0 0.0
    %189 = vmatpush1.msra.mxu0 %v138
    %190 = vmatprep.subr.mxu0 0.0
    %191 = vmatpush1.msra.mxu0 %v139
    %192 = vmatprep.subr.mxu0 0.0
    %193 = vmatpush1.msra.mxu0 %v140
    %194 = vmatprep.subr.mxu0 0.0
    %195 = vmatpush1.msra.mxu0 %v141
    %196 = vmatprep.subr.mxu0 0.0
    %197 = vmatpush1.msra.mxu0 0.0
    %198 = vmatprep.subr.mxu0 0.0
    %199 = vmatpush1.msra.mxu0 0.0
    %200 = vmatprep.subr.mxu0 0.0
    %201 = vmatpush1.msra.mxu0 0.0
    %202 = vmatprep.subr.mxu0 0.0
    %203 = vmatpush1.msra.mxu0 0.0
    %204 = vmatprep.subr.mxu0 0.0
    %205 = vmatpush1.msra.mxu0 0.0
    %206 = vmatprep.subr.mxu0 0.0
    %207 = vmatpush1.msra.mxu0 0.0
    %208 = vmatprep.subr.mxu0 0.0
    %209 = vmatpush1.msra.mxu0 0.0
    %210 = vmatprep.subr.mxu0 0.0
    %211 = vmatpush1.msra.mxu0 0.0
    %212 = vmatprep.subr.mxu0 0.0
    %213 = vmatpush1.msra.mxu0 0.0
    %214 = vmatprep.subr.mxu0 0.0
    %215 = vmatpush1.msra.mxu0 0.0
    %216 = vmatprep.subr.mxu0 0.0
    %217 = vmatpush1.msra.mxu0 0.0
    %218 = vmatprep.subr.mxu0 0.0
    %219 = vmatpush1.msra.mxu0 0.0
    %220 = vmatprep.subr.mxu0 0.0
    %221 = vmatpush1.msra.mxu0 0.0
    %222 = vmatprep.subr.mxu0 0.0
    %223 = vmatpush1.msra.mxu0 0.0
    %224 = vmatprep.subr.mxu0 0.0
    %225 = vmatpush1.msra.mxu0 0.0
    %226 = vmatprep.subr.mxu0 0.0
    %227 = vmatpush1.msra.mxu0 0.0
    %228 = vmatprep.subr.mxu0 0.0
    %229 = vmatpush1.msra.mxu0 0.0
    %230 = vmatprep.subr.mxu0 0.0
    %231 = vmatpush1.msra.mxu0 0.0
    %232 = vmatprep.subr.mxu0 0.0
    %233 = vmatpush1.msra.mxu0 0.0
    %234 = vmatprep.subr.mxu0 0.0
    %235 = vmatpush1.msra.mxu0 0.0
    %236 = vmatprep.subr.mxu0 0.0
    %237 = vmatpush1.msra.mxu0 0.0
    %238 = vmatprep.subr.mxu0 0.0
    %239 = vmatpush1.msra.mxu0 0.0
    %240 = vmatprep.subr.mxu0 0.0
    %241 = vmatpush1.msra.mxu0 0.0
    %242 = vmatprep.subr.mxu0 0.0
    %243 = vmatpush1.msra.mxu0 0.0
    %244 = vmatprep.mubr.f32.mxu0 0.0
    %245 = vmatmul.mubr.f32.gmra.mrb[0].mxu0 %v151
    %v246 = vpop.f32.mrb[0].mxu0
    %v247 = vadd.f32 %v147, %v246
    %v248 = vpop.f32.mrb[0].mxu0
    %249 = vmatprep.mubr.f32.mxu0 0.0
    %250 = vmatmul.mubr.f32.gmra.mrb[0].mxu0 %v154
    %v251 = vpop.f32.mrb[0].mxu0
    %v252 = vadd.f32 %v147, %v251
    %v253 = vpop.f32.mrb[0].mxu0
    %254 = vmatprep.mubr.f32.mxu0 0.0
    %255 = vmatmul.mubr.f32.gmra.mrb[0].mxu0 %v157
    %v256 = vpop.f32.mrb[0].mxu0
    %v257 = vadd.f32 %v147, %v256
    %v258 = vpop.f32.mrb[0].mxu0
    %259 = vmatprep.mubr.f32.mxu0 0.0
    %260 = vmatmul.mubr.f32.gmra.mrb[0].mxu0 %v160
    %v261 = vpop.f32.mrb[0].mxu0
    %v262 = vadd.f32 %v147, %v261
    %v263 = vpop.f32.mrb[0].mxu0
    %264 = vmatprep.mubr.f32.mxu0 0.0
    %265 = vmatmul.mubr.f32.gmra.mrb[0].mxu0 %v163
    %v266 = vpop.f32.mrb[0].mxu0
    %v267 = vadd.f32 %v147, %v266
    %v268 = vpop.f32.mrb[0].mxu0
    %269 = vmatprep.mubr.f32.mxu0 0.0
    %270 = vmatmul.mubr.f32.gmra.mrb[0].mxu0 %v166
    %v271 = vpop.f32.mrb[0].mxu0
    %v272 = vadd.f32 %v147, %v271
    %v273 = vpop.f32.mrb[0].mxu0
    %274 = vmatprep.mubr.f32.mxu0 0.0
    %275 = vmatmul.mubr.f32.gmra.mrb[0].mxu0 %v169
    %v276 = vpop.f32.mrb[0].mxu0
    %v277 = vadd.f32 %v147, %v276
    %v278 = vpop.f32.mrb[0].mxu0
    %279 = vmatprep.mubr.f32.mxu0 0.0
    %280 = vmatmul.mubr.f32.gmra.mrb[0].mxu0 %v172
    %v281 = vpop.f32.mrb[0].mxu0
    %v282 = vadd.f32 %v147, %v281
    %v283 = vpop.f32.mrb[0].mxu0
    %284 = vmatprep.mubr.f32.mxu0 0.0
    %285 = vmatmul.mubr.f32.gmra.mrb[0].mxu0 %v175
    %v286 = vpop.f32.mrb[0].mxu0
    %v287 = vadd.f32 %v147, %v286
    %v288 = vpop.f32.mrb[0].mxu0
    %289 = vmatprep.mubr.f32.mxu0 0.0
    %290 = vmatmul.mubr.f32.gmra.mrb[0].mxu0 %v178
    %v291 = vpop.f32.mrb[0].mxu0
    %v292 = vadd.f32 %v147, %v291
    %v293 = vpop.f32.mrb[0].mxu0
    %294 = vdwg.mxu0
    %295 = vmax.xlane.f32.xlu0 %v247
    %v296 = vpop.xlane.xlu0 %295
    %297 = vmax.xlane.f32.xlu0 %v252
    %v298 = vpop.xlane.xlu0 %297
    %299 = vmax.xlane.f32.xlu0 %v257
    %v300 = vpop.xlane.xlu0 %299
    %301 = vmax.xlane.f32.xlu0 %v262
    %v302 = vpop.xlane.xlu0 %301
    %303 = vmax.xlane.f32.xlu0 %v267
    %v304 = vpop.xlane.xlu0 %303
    %305 = vmax.xlane.f32.xlu0 %v272
    %v306 = vpop.xlane.xlu0 %305
    %307 = vmax.xlane.f32.xlu0 %v277
    %v308 = vpop.xlane.xlu0 %307
    %309 = vmax.xlane.f32.xlu0 %v282
    %v310 = vpop.xlane.xlu0 %309
    %311 = vmax.xlane.f32.xlu0 %v287
    %v312 = vpop.xlane.xlu0 %311
    %313 = vmax.xlane.f32.xlu0 %v292
    %v314 = vpop.xlane.xlu0 %313
    %v315 = vsub.f32 %v247, %v296
    %v316 = vsub.f32 %v252, %v298
    %v317 = vsub.f32 %v257, %v300
    %v318 = vsub.f32 %v262, %v302
    %v319 = vsub.f32 %v267, %v304
    %v320 = vsub.f32 %v272, %v306
    %v321 = vsub.f32 %v277, %v308
    %v322 = vsub.f32 %v282, %v310
    %v323 = vsub.f32 %v287, %v312
    %v324 = vsub.f32 %v292, %v314
    %v325 = vmul.f32 %v315, 1.442695
    %v326 = vpow.pop %v325
    %v327 = vmul.f32 %v316, 1.442695
    %v328 = vpow.pop %v327
    %v329 = vmul.f32 %v317, 1.442695
    %v330 = vpow.pop %v329
    %v331 = vmul.f32 %v318, 1.442695
    %v332 = vpow.pop %v331
    %v333 = vmul.f32 %v319, 1.442695
    %v334 = vpow.pop %v333
    %v335 = vmul.f32 %v320, 1.442695
    %v336 = vpow.pop %v335
    %v337 = vmul.f32 %v321, 1.442695
    %v338 = vpow.pop %v337
    %v339 = vmul.f32 %v322, 1.442695
    %v340 = vpow.pop %v339
    %v341 = vmul.f32 %v323, 1.442695
    %v342 = vpow.pop %v341
    %v343 = vmul.f32 %v324, 1.442695
    %v344 = vpow.pop %v343
    %345 = vadd.xlane.f32.xlu0 %v326
    %v346 = vpop.xlane.xlu0 %345
    %347 = vadd.xlane.f32.xlu0 %v328
    %v348 = vpop.xlane.xlu0 %347
    %349 = vadd.xlane.f32.xlu0 %v330
    %v350 = vpop.xlane.xlu0 %349
    %351 = vadd.xlane.f32.xlu0 %v332
    %v352 = vpop.xlane.xlu0 %351
    %353 = vadd.xlane.f32.xlu0 %v334
    %v354 = vpop.xlane.xlu0 %353
    %355 = vadd.xlane.f32.xlu0 %v336
    %v356 = vpop.xlane.xlu0 %355
    %357 = vadd.xlane.f32.xlu0 %v338
    %v358 = vpop.xlane.xlu0 %357
    %359 = vadd.xlane.f32.xlu0 %v340
    %v360 = vpop.xlane.xlu0 %359
    %361 = vadd.xlane.f32.xlu0 %v342
    %v362 = vpop.xlane.xlu0 %361
    %363 = vadd.xlane.f32.xlu0 %v344
    %v364 = vpop.xlane.xlu0 %363
    %v365 = vrcp.pop %v346
    %v366 = vmul.f32 1.0, %v365
    %v367 = vrcp.pop %v348
    %v368 = vmul.f32 1.0, %v367
    %v369 = vrcp.pop %v350
    %v370 = vmul.f32 1.0, %v369
    %v371 = vrcp.pop %v352
    %v372 = vmul.f32 1.0, %v371
    %v373 = vrcp.pop %v354
    %v374 = vmul.f32 1.0, %v373
    %v375 = vrcp.pop %v356
    %v376 = vmul.f32 1.0, %v375
    %v377 = vrcp.pop %v358
    %v378 = vmul.f32 1.0, %v377
    %v379 = vrcp.pop %v360
    %v380 = vmul.f32 1.0, %v379
    %v381 = vrcp.pop %v362
    %v382 = vmul.f32 1.0, %v381
    %v383 = vrcp.pop %v364
    %v384 = vmul.f32 1.0, %v383
    %v385 = vmul.f32 %v326, %v366
    %v386 = vmul.f32 %v328, %v368
    %v387 = vmul.f32 %v330, %v370
    %v388 = vmul.f32 %v332, %v372
    %v389 = vmul.f32 %v334, %v374
    %v390 = vmul.f32 %v336, %v376
    %v391 = vmul.f32 %v338, %v378
    %v392 = vmul.f32 %v340, %v380
    %v393 = vmul.f32 %v342, %v382
    %v394 = vmul.f32 %v344, %v384
    %395 = vst [vmem:[#allocation2] sm:$0xff] %v385
    %396 = vst [vmem:[#allocation2 + $0x8] sm:$0xff] %v386
    %397 = vst [vmem:[#allocation2 + $0x10] sm:$0xff] %v387
    %398 = vst [vmem:[#allocation2 + $0x18] sm:$0xff] %v388
    %399 = vst [vmem:[#allocation2 + $0x20] sm:$0xff] %v389
    %400 = vst [vmem:[#allocation2 + $0x28] sm:$0xff] %v390
    %401 = vst [vmem:[#allocation2 + $0x30] sm:$0xff] %v391
    %402 = vst [vmem:[#allocation2 + $0x38] sm:$0xff] %v392
    %403 = vst [vmem:[#allocation2 + $0x40] sm:$0xff] %v393
    %404 = vst [vmem:[#allocation2 + $0x48] sm:$0xff] %v394
    %v405 = vadd.f32 %v385, %v386
    %v406 = vadd.f32 %v405, %v387
    %v407 = vadd.f32 %v406, %v388
    %v408 = vadd.f32 %v407, %v389
    %v409 = vadd.f32 %v408, %v390
    %v410 = vadd.f32 %v409, %v391
    %v411 = vadd.f32 %v410, %v392
    %v412 = vadd.f32 %v411, %v393
    %v413 = vadd.f32 %v412, %v394
    %v414 = vrcp.pop 10.0
    %v415 = vmul.f32 %v413, %v414
    %416 = vst [vmem:[#allocation4] sm:$0xff] %v415
    // Predicated region
    $region26: #{mc_dropout_forward.1} parent=1 // pred_check
      _
    $region27: #{mc_dropout_forward.1} parent=1 // pred_check_branch
      %418 = sbr.rel (0) target = $region29
    $region28: #{mc_dropout_forward.1} parent=1 // pred_region
      %s420 = ssub.s32 1280, 1280
      %421 = vsyncadd [#allocation3], %s420
      %s422 = sshll.u32 [#allocation2], 4
      %s423 = int_to_ptr.vmem [resolvable:$true] %s422
      %428 = dma.vmem_to_hbm [thread:$0]  %s423, 1280, %s6, [#allocation3], 128, 128, 8
    $region29: #{mc_dropout_forward.1} parent=1 // pred_fallthru
      _
    // Predicated region
    $region30: #{mc_dropout_forward.1} parent=1 // pred_check
      _
    $region31: #{mc_dropout_forward.1} parent=1 // pred_check_branch
      %430 = sbr.rel (0) target = $region33
    $region32: #{mc_dropout_forward.1} parent=1 // pred_region
      %s432 = ssub.s32 128, 128
      %433 = vsyncadd [#allocation5], %s432
      %s435 = sshll.u32 [#allocation4], 4
      %s436 = int_to_ptr.vmem [resolvable:$true] %s435
      %438 = dma.vmem_to_hbm [thread:$0]  %s436, 128, %s7, [#allocation5]
    $region33: #{mc_dropout_forward.1} parent=1 // pred_fallthru
      _
    // Predicated region
    $region34: #{mc_dropout_forward.1} parent=1 // pred_check
      _
    $region35: #{mc_dropout_forward.1} parent=1 // pred_check_branch
      %440 = sbr.rel (0) target = $region37
    $region36: #{mc_dropout_forward.1} parent=1 // pred_region
      %441 = dma.done [#allocation3], 1280
    $region37: #{mc_dropout_forward.1} parent=1 // pred_fallthru
      _
    // Predicated region
    $region38: #{mc_dropout_forward.1} parent=1 // pred_check
      _
    $region39: #{mc_dropout_forward.1} parent=1 // pred_check_branch
      %443 = sbr.rel (0) target = $region41
    $region40: #{mc_dropout_forward.1} parent=1 // pred_region
      %444 = dma.done [#allocation5], 128
    $region41: #{mc_dropout_forward.1} parent=1 // pred_fallthru
      _
    %445 = vsyncpa [#allocation3], 1
    %446 = vsyncpa [#allocation5], 1

</llo_original>
